<compile_context>
chip_gen: v7x
topology: tpu7x:2x2x1
jax: 0.10.0
libtpu: 0.0.40
codegen_flags: <defaults>
</compile_context>

<pallas_src>
import jax
import jax.numpy as jnp
from jax.experimental import pallas as pl
from jax.experimental.pallas import tpu as pltpu

_EPS = 1e-6


# ----------------------------- kernel ---------------------------------------


def _row_norm_static(x, p):
    """(mean_j |x_j|^p)^(1/p) with a trace-time-constant exponent."""
    p = float(p)
    if p == 2.0:
        return jnp.sqrt(jnp.mean(x * x, axis=-1, keepdims=True))
    absx = jnp.abs(x)
    if p.is_integer() and 1.0 <= p <= 8.0:
        xp = absx
        for _ in range(int(p) - 1):      # repeated multiplies: no exp/log on EUP
            xp = xp * absx
    else:
        xp = absx ** p
    return jnp.mean(xp, axis=-1, keepdims=True) ** (1.0 / p)


def _make_gp_softmax_kernel(static_p):
    def kernel(p_ref, x_ref, o_ref):
        x = x_ref[...].astype(jnp.float32)          # (TB, D), compute in f32

        # ---- PNorm denominator (per row) ----
        if static_p is not None:
            norm = _row_norm_static(x, static_p)
        else:
            p = p_ref[0]                             # learnable exponent (SMEM)
            norm = jax.lax.cond(
                p == 2.0,
                # fast path: x*x (no abs pass), sqrt on the EUP
                lambda xx: jnp.sqrt(jnp.mean(xx * xx, axis=-1, keepdims=True)),
                # generic path: exp(p*log|x|) fallback
                lambda xx: jnp.mean(jnp.abs(xx) ** p, axis=-1, keepdims=True)
                ** (1.0 / p),
                x,
            )

        inv_norm = pl.reciprocal(norm + _EPS, approx=False)        # (TB, 1)

        # ---- Softmax over the feature dim, fused rescale ----
        # max(x*inv_norm) == inv_norm*max(x) since inv_norm > 0, so we never
        # materialize y = x*inv_norm (one less streaming pass over the block).
        mx = jnp.max(x, axis=-1, keepdims=True)
        e = jnp.exp(inv_norm * (x - mx))
        inv_denom = pl.reciprocal(jnp.sum(e, axis=-1, keepdims=True),
                                  approx=False)                    # (TB, 1)
        o_ref[...] = (e * inv_denom).astype(o_ref.dtype)

    return kernel


# ----------------------------- tiling ----------------------------------------


def _round_up(v, m):
    return -(-v // m) * m


def _tpu_config():
    """(physical VMEM bytes per core, tensorcores per chip) with safe fallback."""
    try:
        info = pltpu.get_tpu_info()
        vmem_cap = int(info.vmem_capacity_bytes)
        if vmem_cap <= 0:
            raise ValueError
    except Exception:
        # Conservative fallback: small (v7x-sized) budget, no forced batch split.
        return 64 * 1024 * 1024, 1
    # Heuristic: v7x exposes ~64 MiB VMEM per TensorCore and has 2 TCs/chip;
    # v5e/v6e expose 128 MiB with a single TC.
    n_cores = 2 if vmem_cap <= 96 * 1024 * 1024 else 1
    return vmem_cap, n_cores


def _pick_row_tile(B, D, itemsize, vmem_cap, n_cores):
    # dtype-native sublane packing: f32 -> 8 rows, bf16 -> 16, int8/fp8 -> 32.
    row_mult = max(8, 32 // max(itemsize, 1))
    b_ceil = _round_up(B, row_mult)

    # ~37.5% of physical VMEM as working set (double-buffered in/out blocks plus
    # a handful of live f32 temporaries), sized in bytes — no fixed row cap.
    budget = (vmem_cap * 3) // 8
    per_row = D * (2 * itemsize + 2 * itemsize + 4 * 4)
    rt = budget // max(per_row, 1)
    rt = max(row_mult, (rt // row_mult) * row_mult)
    rt = min(rt, b_ceil)

    if n_cores >= 2:
        # Multi-TC (v7x): keep both cores busy with an even number of grid steps.
        steps = -(-B // rt)
        if steps == 1 and b_ceil > row_mult:
            rt = _round_up(-(-b_ceil // 2), row_mult)
        elif steps > 1 and steps % 2 == 1:
            rt = max(row_mult, _round_up(-(-B // (steps + 1)), row_mult))
    return max(row_mult, min(rt, b_ceil))


# ----------------------------- wrapper ----------------------------------------


def gp_softmax(x, p, *, row_tile=None, static_p=None):
    """x: (B, D) float array (f32 or bf16); p: (1,) float32 learnable exponent.

    static_p: optional Python float — pass when the exponent is known at trace
    time to specialize the pow (avoids the runtime p==2.0 equality check and the
    exp/log path on v5e's single EUP). The runtime value in `p` is then ignored.
    """
    B, D = x.shape
    itemsize = jnp.dtype(x.dtype).itemsize
    vmem_cap, n_cores = _tpu_config()
    if row_tile is None:
        row_tile = _pick_row_tile(B, D, itemsize, vmem_cap, n_cores)

    grid = (-(-B // row_tile),)          # ragged last block handled by Pallas
    grid_spec = pltpu.PrefetchScalarGridSpec(
        num_scalar_prefetch=1,                                    # p -> SMEM
        grid=grid,
        in_specs=[pl.BlockSpec((row_tile, D), lambda i, p_ref: (i, 0))],
        out_specs=pl.BlockSpec((row_tile, D), lambda i, p_ref: (i, 0)),
    )
    return pl.pallas_call(
        _make_gp_softmax_kernel(static_p),
        out_shape=jax.ShapeDtypeStruct((B, D), x.dtype),
        grid_spec=grid_spec,
        compiler_params=pltpu.CompilerParams(
            dimension_semantics=("parallel",),
            vmem_limit_bytes=int((vmem_cap * 3) // 4),
        ),
    )(p, x)


def gp_softmax_ref(x, p):
    """Pure-JAX reference for correctness checking."""
    xf = x.astype(jnp.float32)
    absx = jnp.abs(xf)
    norm = jnp.mean(absx ** p[0], axis=-1, keepdims=True) ** (1.0 / p[0])
    y = xf / (norm + _EPS)
    return jax.nn.softmax(y, axis=-1).astype(x.dtype)


if __name__ == "__main__":
    key = jax.random.PRNGKey(0)
    B, D = 16, 128
    x = jax.random.normal(key, (B, D), dtype=jnp.float32)

    # Deterministic parameter init: PNorm exponent p = 2.0 (fast path).
    p2 = jnp.array([2.0], dtype=jnp.float32)
    out = jax.block_until_ready(gp_softmax(x, p2))
    ref = gp_softmax_ref(x, p2)
    assert out.shape == (B, D) and out.dtype == x.dtype
    assert bool(jnp.allclose(out, ref, atol=2e-5, rtol=1e-4)), "mismatch (p=2)"
    assert bool(jnp.allclose(jnp.sum(out, axis=-1), 1.0, atol=1e-4))

    # Generic-exponent runtime path (p != 2).
    p3 = jnp.array([3.0], dtype=jnp.float32)
    out3 = jax.block_until_ready(gp_softmax(x, p3))
    ref3 = gp_softmax_ref(x, p3)
    assert bool(jnp.allclose(out3, ref3, atol=2e-5, rtol=1e-4)), "mismatch (p=3)"

    # Trace-time-specialized exponent (no runtime branch, no exp/log pow).
    out2s = jax.block_until_ready(gp_softmax(x, p2, static_p=2.0))
    assert bool(jnp.allclose(out2s, ref, atol=2e-5, rtol=1e-4)), "mismatch (static p=2)"

    # Non-multiple-of-tile batch: exercises the ragged last block (no padding).
    x10 = jax.random.normal(jax.random.PRNGKey(1), (10, D), dtype=jnp.float32)
    out10 = jax.block_until_ready(gp_softmax(x10, p2, row_tile=8))
    ref10 = gp_softmax_ref(x10, p2)
    assert out10.shape == (10, D)
    assert bool(jnp.allclose(out10, ref10, atol=2e-5, rtol=1e-4)), "mismatch (B=10)"

    # bf16 input (16-row sublane-native tiles, f32 compute inside the kernel).
    xb = jax.random.normal(jax.random.PRNGKey(2), (B, D), dtype=jnp.bfloat16)
    outb = jax.block_until_ready(gp_softmax(xb, p2))
    refb = gp_softmax_ref(xb, p2)
    assert outb.dtype == jnp.bfloat16
    assert bool(jnp.allclose(outb.astype(jnp.float32), refb.astype(jnp.float32),
                             atol=1e-2, rtol=1e-2)), "mismatch (bf16)"

    print("KERNEL_OK")
</pallas_src>

<mosaic_0001>
module attributes {stable_mosaic.version = 11 : i64} {
  func.func @kernel(%arg0: i32, %arg1: memref<1xf32, #tpu.memory_space<smem>>, %arg2: memref<16x128xf32, #tpu.memory_space<vmem>>, %arg3: memref<16x128xf32, #tpu.memory_space<vmem>>) attributes {dimension_semantics = [#tpu.dimension_semantics<parallel>], iteration_bounds = array<i64: 1>, scalar_prefetch = 1 : i64, scratch_operands = 0 : i64, tpu.core_type = #tpu.core_type<tc>, window_params = [{transform_indices = @transform_0, window_bounds = array<i64: 16, 128>}, {transform_indices = @transform_1, window_bounds = array<i64: 16, 128>}]} {
    %c0 = arith.constant 0 : index
    %c0_0 = arith.constant 0 : index
    %0 = vector.load %arg2[%c0, %c0_0] : memref<16x128xf32, #tpu.memory_space<vmem>>, vector<16x128xf32>
    %c0_1 = arith.constant 0 : index
    %1 = memref.load %arg1[%c0_1] : memref<1xf32, #tpu.memory_space<smem>>
    %cst = arith.constant 2.000000e+00 : f32
    %2 = arith.cmpf oeq, %1, %cst : f32
    %3 = arith.extui %2 : i1 to i32
    %c0_i32 = arith.constant 0 : i32
    %4 = arith.cmpi ne, %3, %c0_i32 : i32
    %5 = scf.if %4 -> (vector<16x1xf32>) {
      %22 = arith.mulf %0, %0 : vector<16x128xf32>
      %cst_7 = arith.constant dense<0.000000e+00> : vector<16xf32>
      %23 = vector.multi_reduction <add>, %22, %cst_7 [1] : vector<16x128xf32> to vector<16xf32>
      %24 = vector.shape_cast %23 : vector<16xf32> to vector<16x1xf32>
      %cst_8 = arith.constant 1.280000e+02 : f32
      %25 = vector.broadcast %cst_8 : f32 to vector<16x1xf32>
      %26 = arith.divf %24, %25 : vector<16x1xf32>
      %27 = math.sqrt %26 : vector<16x1xf32>
      scf.yield %27 : vector<16x1xf32>
    } else {
      %22 = math.absf %0 : vector<16x128xf32>
      %23 = vector.broadcast %1 : f32 to vector<16x128xf32>
      %24 = math.powf %22, %23 : vector<16x128xf32>
      %cst_7 = arith.constant dense<0.000000e+00> : vector<16xf32>
      %25 = vector.multi_reduction <add>, %24, %cst_7 [1] : vector<16x128xf32> to vector<16xf32>
      %26 = vector.shape_cast %25 : vector<16xf32> to vector<16x1xf32>
      %cst_8 = arith.constant 1.280000e+02 : f32
      %27 = vector.broadcast %cst_8 : f32 to vector<16x1xf32>
      %28 = arith.divf %26, %27 : vector<16x1xf32>
      %cst_9 = arith.constant 1.000000e+00 : f32
      %29 = arith.divf %cst_9, %1 : f32
      %30 = vector.broadcast %29 : f32 to vector<16x1xf32>
      %31 = math.powf %28, %30 : vector<16x1xf32>
      scf.yield %31 : vector<16x1xf32>
    }
    %cst_2 = arith.constant 9.99999997E-7 : f32
    %6 = vector.broadcast %cst_2 : f32 to vector<16x1xf32>
    %7 = arith.addf %5, %6 : vector<16x1xf32>
    %8 = tpu.reciprocal %7 : vector<16x1xf32> -> vector<16x1xf32>
    %cst_3 = arith.constant dense<0xFF800000> : vector<16xf32>
    %9 = vector.multi_reduction <maximumf>, %0, %cst_3 [1] : vector<16x128xf32> to vector<16xf32>
    %10 = vector.shape_cast %9 : vector<16xf32> to vector<16x1xf32>
    %11 = vector.broadcast %10 : vector<16x1xf32> to vector<16x128xf32>
    %12 = arith.subf %0, %11 : vector<16x128xf32>
    %13 = vector.broadcast %8 : vector<16x1xf32> to vector<16x128xf32>
    %14 = arith.mulf %13, %12 : vector<16x128xf32>
    %15 = math.exp %14 : vector<16x128xf32>
    %cst_4 = arith.constant dense<0.000000e+00> : vector<16xf32>
    %16 = vector.multi_reduction <add>, %15, %cst_4 [1] : vector<16x128xf32> to vector<16xf32>
    %17 = vector.shape_cast %16 : vector<16xf32> to vector<16x1xf32>
    %18 = tpu.reciprocal %17 : vector<16x1xf32> -> vector<16x1xf32>
    %19 = vector.broadcast %18 : vector<16x1xf32> to vector<16x128xf32>
    %20 = arith.mulf %15, %19 : vector<16x128xf32>
    %c0_5 = arith.constant 0 : index
    %c0_6 = arith.constant 0 : index
    %21 = vector.load %arg3[%c0_5, %c0_6] : memref<16x128xf32, #tpu.memory_space<vmem>>, vector<16x128xf32>
    tpu.vector_store %arg3[%c0_5, %c0_6], %20 {strides = array<i32>} : memref<16x128xf32, #tpu.memory_space<vmem>>, vector<16x128xf32>,
    return
  }
  func.func @transform_0(%arg0: i32, %arg1: memref<1xf32, #tpu.memory_space<smem>>) -> (i32, i32) {
    %c0_i32 = arith.constant 0 : i32
    %c0_i32_0 = arith.constant 0 : i32
    return %arg0, %c0_i32 : i32, i32
  }
  func.func @transform_1(%arg0: i32, %arg1: memref<1xf32, #tpu.memory_space<smem>>) -> (i32, i32) {
    %c0_i32 = arith.constant 0 : i32
    %c0_i32_0 = arith.constant 0 : i32
    return %arg0, %c0_i32 : i32, i32
  }
}

</mosaic_0001>

<llo_original>
// kernel: tpu_custom_call.1
$region0: #{tpu_custom_call.1}
  #allocation0 [shape = 'u32[]', space=smem, size = 0x4, offset = 0x4, fixed_abs, tag = 'smem constant byte address 0x4 - core index']
  #allocation1 [shape = 'u32[144,128]{1,0:T(1,128)}', space=vmem, size = 0x12000, scoped, tag = 'internal scratch']
  #allocation2 [shape = 's32[1]{0}', space=sflag, size = 0x4, scoped, tag = 'scoped memory for tpu_custom_call.1']
  #allocation3 [shape = 'f32[1]{0:T(128)S(6)}', space=smem, size = 0x200, scoped, tag = 'prefetched SMEM operand 0']
  %s0 = inlined_call_operand.<no memory space> [shape: f32[1], index: 0, kind: input, shape index: {}]
  %s1 = inlined_call_operand.hbm [shape: f32[16,128], index: 1, kind: input, shape index: {}]
  %s2 = inlined_call_operand.hbm [shape: f32[16,128], index: 2, kind: output, shape index: {}]
  %s3 = sld [smem:[#allocation0]]
  $region26: #{tpu_custom_call.1} parent=0
    _
  %s5 = ssub.s32 1, %s3
  %s6 = scalar_select 0, %s5, %s3
  %7 = sst [smem:[#allocation3]] %s0
  $region1: #{tpu_custom_call.1} parent=0
    #allocation4 [shape = 'u8[8192]{0}', space=vmem, size = 0x2000, scoped, tag = 'input window, operand 1, single buffered']
    #allocation5 [shape = 's32[1]{0}', space=sflag, size = 0x4, scoped, tag = 'scoped memory for tpu_custom_call.1']
    #allocation6 [shape = 's32[1]{0}', space=sflag, size = 0x4, scoped, tag = 'scoped memory for tpu_custom_call.1']
    #allocation7 [shape = 'u8[8192]{0}', space=vmem, size = 0x2000, scoped, tag = 'output window, operand 0, single buffered']
    %8 = vsyncpa [#allocation5], 0
    %9 = vsyncpa [#allocation6], 0
    // Predicated region
    $region2: #{tpu_custom_call.1} parent=1 // pred_check
      _
    $region3: #{tpu_custom_call.1} parent=1 // pred_check_branch
      %11 = sbr.rel (0) target = $region5
    $region4: #{tpu_custom_call.1} parent=1 // pred_region
      %s13 = ssub.s32 256, 256
      %14 = vsyncadd [#allocation5], %s13
      %s15 = sshll.u32 [#allocation4], 4
      %s16 = int_to_ptr.vmem [resolvable:$true] %s15
      %21 = dma.hbm_to_vmem [thread:$0]  %s1, 256, %s16, [#allocation5], 128, 128, 8
    $region5: #{tpu_custom_call.1} parent=1 // pred_fallthru
      _
    // Predicated region
    $region6: #{tpu_custom_call.1} parent=1 // pred_check
      _
    $region7: #{tpu_custom_call.1} parent=1 // pred_check_branch
      %23 = sbr.rel (0) target = $region9
    $region8: #{tpu_custom_call.1} parent=1 // pred_region
      %24 = dma.done [#allocation5], 256
    $region9: #{tpu_custom_call.1} parent=1 // pred_fallthru
      _
    %v25 = vld [vmem:[#allocation4] sm:$0xff]
    %v26 = vld [vmem:[#allocation4 + $0x8] sm:$0xff]
    %s27 = sld [smem:[#allocation3]]
    %p28 = scmp.eq.f32.partialorder %s27, 2.0
    // Predicated region
    $region10: #{tpu_custom_call.1} parent=1 // pred_check
      %p29 = pneg %p28
    $region11: #{tpu_custom_call.1} parent=1 // pred_check_branch
      %31 = sbr.rel (%p29) target = $region13
    $region12: #{tpu_custom_call.1} parent=1 // pred_region
      %v32 = vmul.f32 %v25, %v25
      %v33 = vmul.f32 %v26, %v26
      %34 = vadd.xlane.f32.xlu0 %v32
      %v35 = vpop.xlane.xlu0 %34
      %36 = vadd.xlane.f32.xlu0 %v33
      %v37 = vpop.xlane.xlu0 %36
      %v38 = vrcp.pop 128.0
      %v39 = vmul.f32 %v35, %v38
      %v40 = vmul.f32 %v37, %v38
      %v41 = vrsqrt.pop %v39
      %v42 = vmul.f32 %v39, %v41
      %vm43 = vcmp.eq.f32.partialorder %v39, inf
      %v44 = vsel %vm43, %v39, %v42
      %vm45 = vcmp.eq.f32.partialorder %v39, 0.0
      %v46 = vand.u32 %v39, 2147483648
      %v47 = vsel %vm45, %v46, %v44
      %v48 = vrsqrt.pop %v40
      %v49 = vmul.f32 %v40, %v48
      %vm50 = vcmp.eq.f32.partialorder %v40, inf
      %v51 = vsel %vm50, %v40, %v49
      %vm52 = vcmp.eq.f32.partialorder %v40, 0.0
      %v53 = vand.u32 %v40, 2147483648
      %v54 = vsel %vm52, %v53, %v51
    $region13: #{tpu_custom_call.1} parent=1 // pred_fallthru
      %v55 = vphi 0, %v47
      %v56 = vphi 0, %v54
    %p57 = pneg %p28
    // Predicated region
    $region14: #{tpu_custom_call.1} parent=1 // pred_check
      _
    $region15: #{tpu_custom_call.1} parent=1 // pred_check_branch
      %59 = sbr.rel (%p28) target = $region17
    $region16: #{tpu_custom_call.1} parent=1 // pred_region
      %v60 = vand.u32 2147483647, %v25
      %v61 = vand.u32 2147483647, %v26
      %v62 = vstv %s27
      %v63 = vpow.f32 %v60, %v62
      %v64 = vpow.f32 %v61, %v62
      %65 = vadd.xlane.f32.xlu0 %v63
      %v66 = vpop.xlane.xlu0 %65
      %67 = vadd.xlane.f32.xlu0 %v64
      %v68 = vpop.xlane.xlu0 %67
      %v69 = vrcp.pop 128.0
      %v70 = vmul.f32 %v66, %v69
      %v71 = vmul.f32 %v68, %v69
      %v72 = vstv %s27
      %v73 = vrcp.pop %v72
      %s74 = vtos %v73
      %v75 = vstv %s74
      %v76 = vpow.f32 %v70, %v75
      %v77 = vpow.f32 %v71, %v75
    $region17: #{tpu_custom_call.1} parent=1 // pred_fallthru
      %v78 = vphi %v55, %v76
      %v79 = vphi %v56, %v77
    %v80 = vadd.f32 %v78, 1e-06
    %v81 = vadd.f32 %v79, 1e-06
    %v82 = vrcp.pop %v80
    %v83 = vrcp.pop %v81
    %84 = vmax.xlane.f32.xlu0 %v25
    %v85 = vpop.xlane.xlu0 %84
    %86 = vmax.xlane.f32.xlu0 %v26
    %v87 = vpop.xlane.xlu0 %86
    %v88 = vsub.f32 %v25, %v85
    %v89 = vsub.f32 %v26, %v87
    %v90 = vmul.f32 %v82, %v88
    %v91 = vmul.f32 %v83, %v89
    %v92 = vmul.f32 %v90, 1.442695
    %v93 = vpow.pop %v92
    %v94 = vmul.f32 %v91, 1.442695
    %v95 = vpow.pop %v94
    %96 = vadd.xlane.f32.xlu0 %v93
    %v97 = vpop.xlane.xlu0 %96
    %98 = vadd.xlane.f32.xlu0 %v95
    %v99 = vpop.xlane.xlu0 %98
    %v100 = vrcp.pop %v97
    %v101 = vrcp.pop %v99
    %v102 = vmul.f32 %v93, %v100
    %v103 = vmul.f32 %v95, %v101
    %104 = vst [vmem:[#allocation7] sm:$0xff] %v102
    %105 = vst [vmem:[#allocation7 + $0x8] sm:$0xff] %v103
    // Predicated region
    $region18: #{tpu_custom_call.1} parent=1 // pred_check
      _
    $region19: #{tpu_custom_call.1} parent=1 // pred_check_branch
      %107 = sbr.rel (0) target = $region21
    $region20: #{tpu_custom_call.1} parent=1 // pred_region
      %s109 = ssub.s32 256, 256
      %110 = vsyncadd [#allocation6], %s109
      %s111 = sshll.u32 [#allocation7], 4
      %s112 = int_to_ptr.vmem [resolvable:$true] %s111
      %117 = dma.vmem_to_hbm [thread:$0]  %s112, 256, %s2, [#allocation6], 128, 128, 8
    $region21: #{tpu_custom_call.1} parent=1 // pred_fallthru
      _
    // Predicated region
    $region22: #{tpu_custom_call.1} parent=1 // pred_check
      _
    $region23: #{tpu_custom_call.1} parent=1 // pred_check_branch
      %119 = sbr.rel (0) target = $region25
    $region24: #{tpu_custom_call.1} parent=1 // pred_region
      %120 = dma.done [#allocation6], 256
    $region25: #{tpu_custom_call.1} parent=1 // pred_fallthru
      _
    %121 = vsyncpa [#allocation5], 1
    %122 = vsyncpa [#allocation6], 1

</llo_original>
